<compile_context>
chip_gen: v6e
topology: v6e:2x2x1
jax: 0.10.0
libtpu: 0.0.40
codegen_flags: <defaults>
</compile_context>

<pallas_src>
import jax
import jax.numpy as jnp
from jax.experimental import pallas as pl
from jax.experimental.pallas import tpu as pltpu


def _round_up(x, m):
    return ((x + m - 1) // m) * m


def _classifier_head_kernel(x_ref, w1_ref, b1_ref, w2_ref, b2_ref, o_ref):
    # x_ref: [TB, HW, C] feature-map block, channels on the 128-lane axis.
    x = jnp.maximum(x_ref[...], 0.0)                 # F.relu(features), f32 on VPU
    pooled = jnp.mean(x, axis=1)                     # adaptive_avg_pool2d(1) -> [TB, C]

    # FcNetwork: Linear -> ReLU -> (Dropout == identity in eval) -> Linear -> LogSoftmax
    # bf16 MXU operands, f32 accumulation.
    h = jnp.dot(pooled.astype(jnp.bfloat16), w1_ref[...],
                preferred_element_type=jnp.float32) + b1_ref[...]
    h = jnp.maximum(h, 0.0)
    # TODO(synk): Dropout is identity at inference time, so it is omitted.
    logits = jnp.dot(h.astype(jnp.bfloat16), w2_ref[...],
                     preferred_element_type=jnp.float32) + b2_ref[...]

    # log_softmax over the (128-padded) class axis; padded lanes carry a
    # -1e30 bias so exp() contributes exactly 0 to the normalizer.
    m = jnp.max(logits, axis=-1, keepdims=True)
    lse = m + jnp.log(jnp.sum(jnp.exp(logits - m), axis=-1, keepdims=True))
    o_ref[...] = logits - lse


def densenet_classifier_forward(x_nchw, w1, b1, w2, b2, *, batch_block=8):
    """x_nchw: [B, C, H, W] float32 backbone feature maps (NCHW, PyTorch layout).
    w1: [C, hidden], b1: [hidden], w2: [hidden, 102], b2: [102].
    Returns log-probabilities [B, num_classes]."""
    B, C, H, W = x_nchw.shape
    HW = H * W
    hidden = w1.shape[1]
    num_classes = w2.shape[1]

    TB = batch_block
    Bp = _round_up(B, TB)
    Hp = _round_up(hidden, 128)       # lane-dense hidden axis
    NCp = _round_up(num_classes, 128)  # lane-dense class axis

    # Channels-on-lanes layout: [B, HW, C] (one transpose in the wrapper).
    x = jnp.transpose(x_nchw.reshape(B, C, HW), (0, 2, 1))
    if Bp != B:
        x = jnp.pad(x, ((0, Bp - B), (0, 0), (0, 0)))

    # Pad weights/biases. Padded hidden units: zero weights + zero bias ->
    # ReLU(0)=0 and zero rows in w2, so they contribute nothing.  Padded class
    # columns: zero weights + (-1e30) bias -> excluded from the softmax sum.
    w1p = jnp.pad(w1, ((0, 0), (0, Hp - hidden))).astype(jnp.bfloat16)
    b1p = jnp.pad(b1, (0, Hp - hidden)).reshape(1, Hp).astype(jnp.float32)
    w2p = jnp.pad(w2, ((0, Hp - hidden), (0, NCp - num_classes))).astype(jnp.bfloat16)
    b2p = jnp.pad(b2, (0, NCp - num_classes),
                  constant_values=-1e30).reshape(1, NCp).astype(jnp.float32)

    # VMEM budget from the actual (double-buffered) block footprint, capped so
    # it is safe on v7x's 64 MiB physical VMEM.
    x_blk = TB * HW * C * 4
    w_res = (C * Hp + Hp * NCp) * 2          # bf16 weights
    b_res = (Hp + NCp) * 4
    out_blk = TB * NCp * 4
    vmem_limit = min(48 << 20, 2 * (x_blk + w_res + b_res + out_blk) + (4 << 20))

    grid = (Bp // TB,)
    out = pl.pallas_call(
        _classifier_head_kernel,
        out_shape=jax.ShapeDtypeStruct((Bp, NCp), jnp.float32),
        grid=grid,
        in_specs=[
            pl.BlockSpec((TB, HW, C), lambda i: (i, 0, 0)),   # feature maps, tiled over batch
            pl.BlockSpec((C, Hp), lambda i: (0, 0)),          # w1: resident
            pl.BlockSpec((1, Hp), lambda i: (0, 0)),          # b1: resident
            pl.BlockSpec((Hp, NCp), lambda i: (0, 0)),        # w2: resident
            pl.BlockSpec((1, NCp), lambda i: (0, 0)),         # b2: resident
        ],
        out_specs=pl.BlockSpec((TB, NCp), lambda i: (i, 0)),
        compiler_params=pltpu.CompilerParams(
            dimension_semantics=("parallel",),
            vmem_limit_bytes=vmem_limit,
        ),
    )(x, w1p, b1p, w2p, b2p)

    return out[:B, :num_classes]


def reference_forward(x_nchw, w1, b1, w2, b2):
    x = jnp.maximum(x_nchw, 0.0)
    pooled = jnp.mean(x, axis=(2, 3))
    h = jnp.maximum(pooled @ w1 + b1, 0.0)
    logits = h @ w2 + b2
    return jax.nn.log_softmax(logits, axis=-1)


if __name__ == "__main__":
    key = jax.random.PRNGKey(0)
    k_x, k_w1, k_b1, k_w2, k_b2 = jax.random.split(key, 5)

    # Small shapes consistent with the module's structure:
    #   B=2 images, C=256 backbone feature channels, 8x8 spatial map,
    #   hidden_units=64, 102 flower classes.
    B, C, H, W = 2, 256, 8, 8
    HIDDEN, NUM_CLASSES = 64, 102

    x = jax.random.normal(k_x, (B, C, H, W), dtype=jnp.float32)
    w1 = jax.random.normal(k_w1, (C, HIDDEN), dtype=jnp.float32) * 0.05
    b1 = jax.random.normal(k_b1, (HIDDEN,), dtype=jnp.float32) * 0.01
    w2 = jax.random.normal(k_w2, (HIDDEN, NUM_CLASSES), dtype=jnp.float32) * 0.05
    b2 = jax.random.normal(k_b2, (NUM_CLASSES,), dtype=jnp.float32) * 0.01

    out = densenet_classifier_forward(x, w1, b1, w2, b2)
    out = jax.block_until_ready(out)

    ref = reference_forward(x, w1, b1, w2, b2)
    assert out.shape == (B, NUM_CLASSES)
    # bf16 MXU operands vs f32 reference -> loose-but-meaningful tolerance.
    assert jnp.allclose(out, ref, atol=5e-2, rtol=5e-2), "mismatch vs. JAX reference"

    print("KERNEL_OK")
</pallas_src>

<mosaic_0001>
module attributes {stable_mosaic.version = 11 : i64} {
  func.func @_classifier_head_kernel(%arg0: i32, %arg1: memref<8x64x256xf32, #tpu.memory_space<vmem>>, %arg2: memref<256x128xbf16, #tpu.memory_space<vmem>>, %arg3: memref<1x128xf32, #tpu.memory_space<vmem>>, %arg4: memref<128x128xbf16, #tpu.memory_space<vmem>>, %arg5: memref<1x128xf32, #tpu.memory_space<vmem>>, %arg6: memref<8x128xf32, #tpu.memory_space<vmem>>) attributes {dimension_semantics = [#tpu.dimension_semantics<parallel>], iteration_bounds = array<i64: 1>, scalar_prefetch = 0 : i64, scratch_operands = 0 : i64, tpu.core_type = #tpu.core_type<tc>, window_params = [{transform_indices = @transform_0, window_bounds = array<i64: 8, 64, 256>}, {pipeline_mode = #tpu.pipeline_mode<synchronous>, transform_indices = @transform_1, window_bounds = array<i64: 256, 128>}, {pipeline_mode = #tpu.pipeline_mode<synchronous>, transform_indices = @transform_2, window_bounds = array<i64: 1, 128>}, {pipeline_mode = #tpu.pipeline_mode<synchronous>, transform_indices = @transform_3, window_bounds = array<i64: 128, 128>}, {pipeline_mode = #tpu.pipeline_mode<synchronous>, transform_indices = @transform_4, window_bounds = array<i64: 1, 128>}, {transform_indices = @transform_5, window_bounds = array<i64: 8, 128>}]} {
    %c0 = arith.constant 0 : index
    %c0_0 = arith.constant 0 : index
    %c0_1 = arith.constant 0 : index
    %0 = vector.load %arg1[%c0, %c0_0, %c0_1] : memref<8x64x256xf32, #tpu.memory_space<vmem>>, vector<8x64x256xf32>
    %cst = arith.constant 0.000000e+00 : f32
    %1 = vector.broadcast %cst : f32 to vector<8x64x256xf32>
    %2 = arith.maximumf %0, %1 : vector<8x64x256xf32>
    %cst_2 = arith.constant dense<0.000000e+00> : vector<8x256xf32>
    %3 = vector.multi_reduction <add>, %2, %cst_2 [1] : vector<8x64x256xf32> to vector<8x256xf32>
    %cst_3 = arith.constant 6.400000e+01 : f32
    %4 = vector.broadcast %cst_3 : f32 to vector<8x256xf32>
    %5 = arith.divf %3, %4 : vector<8x256xf32>
    %6 = arith.truncf %5 : vector<8x256xf32> to vector<8x256xbf16>
    %c0_4 = arith.constant 0 : index
    %c0_5 = arith.constant 0 : index
    %7 = vector.load %arg2[%c0_4, %c0_5] : memref<256x128xbf16, #tpu.memory_space<vmem>>, vector<256x128xbf16>
    %cst_6 = arith.constant dense<0.000000e+00> : vector<8x128xf32>
    %8 = tpu.matmul %6, %7, %cst_6 {dimension_numbers = #tpu.dot_dimension_numbers<[1], [0], [0], [1], [0, 0, 1, 1], [], []>} : vector<8x256xbf16>, vector<256x128xbf16>, vector<8x128xf32> -> vector<8x128xf32>
    %c0_7 = arith.constant 0 : index
    %c0_8 = arith.constant 0 : index
    %9 = vector.load %arg3[%c0_7, %c0_8] : memref<1x128xf32, #tpu.memory_space<vmem>>, vector<1x128xf32>
    %10 = vector.broadcast %9 : vector<1x128xf32> to vector<8x128xf32>
    %11 = arith.addf %8, %10 : vector<8x128xf32>
    %cst_9 = arith.constant 0.000000e+00 : f32
    %12 = vector.broadcast %cst_9 : f32 to vector<8x128xf32>
    %13 = arith.maximumf %11, %12 : vector<8x128xf32>
    %14 = arith.truncf %13 : vector<8x128xf32> to vector<8x128xbf16>
    %c0_10 = arith.constant 0 : index
    %c0_11 = arith.constant 0 : index
    %15 = vector.load %arg4[%c0_10, %c0_11] : memref<128x128xbf16, #tpu.memory_space<vmem>>, vector<128x128xbf16>
    %cst_12 = arith.constant dense<0.000000e+00> : vector<8x128xf32>
    %16 = tpu.matmul %14, %15, %cst_12 {dimension_numbers = #tpu.dot_dimension_numbers<[1], [0], [0], [1], [0, 0, 1, 1], [], []>} : vector<8x128xbf16>, vector<128x128xbf16>, vector<8x128xf32> -> vector<8x128xf32>
    %c0_13 = arith.constant 0 : index
    %c0_14 = arith.constant 0 : index
    %17 = vector.load %arg5[%c0_13, %c0_14] : memref<1x128xf32, #tpu.memory_space<vmem>>, vector<1x128xf32>
    %18 = vector.broadcast %17 : vector<1x128xf32> to vector<8x128xf32>
    %19 = arith.addf %16, %18 : vector<8x128xf32>
    %cst_15 = arith.constant dense<0xFF800000> : vector<8xf32>
    %20 = vector.multi_reduction <maximumf>, %19, %cst_15 [1] : vector<8x128xf32> to vector<8xf32>
    %21 = vector.shape_cast %20 : vector<8xf32> to vector<8x1xf32>
    %22 = vector.broadcast %21 : vector<8x1xf32> to vector<8x128xf32>
    %23 = arith.subf %19, %22 : vector<8x128xf32>
    %24 = math.exp %23 : vector<8x128xf32>
    %cst_16 = arith.constant dense<0.000000e+00> : vector<8xf32>
    %25 = vector.multi_reduction <add>, %24, %cst_16 [1] : vector<8x128xf32> to vector<8xf32>
    %26 = vector.shape_cast %25 : vector<8xf32> to vector<8x1xf32>
    %27 = math.log %26 : vector<8x1xf32>
    %28 = arith.addf %21, %27 : vector<8x1xf32>
    %29 = vector.broadcast %28 : vector<8x1xf32> to vector<8x128xf32>
    %30 = arith.subf %19, %29 : vector<8x128xf32>
    %c0_17 = arith.constant 0 : index
    %c0_18 = arith.constant 0 : index
    %31 = vector.load %arg6[%c0_17, %c0_18] : memref<8x128xf32, #tpu.memory_space<vmem>>, vector<8x128xf32>
    tpu.vector_store %arg6[%c0_17, %c0_18], %30 {strides = array<i32>} : memref<8x128xf32, #tpu.memory_space<vmem>>, vector<8x128xf32>,
    return
  }
  func.func @transform_0(%arg0: i32) -> (i32, i32, i32) {
    %c0_i32 = arith.constant 0 : i32
    %c0_i32_0 = arith.constant 0 : i32
    %c0_i32_1 = arith.constant 0 : i32
    return %arg0, %c0_i32, %c0_i32_0 : i32, i32, i32
  }
  func.func @transform_1(%arg0: i32) -> (i32, i32) {
    %c0_i32 = arith.constant 0 : i32
    %c0_i32_0 = arith.constant 0 : i32
    %c0_i32_1 = arith.constant 0 : i32
    return %c0_i32, %c0_i32_0 : i32, i32
  }
  func.func @transform_2(%arg0: i32) -> (i32, i32) {
    %c0_i32 = arith.constant 0 : i32
    %c0_i32_0 = arith.constant 0 : i32
    %c0_i32_1 = arith.constant 0 : i32
    return %c0_i32, %c0_i32_0 : i32, i32
  }
  func.func @transform_3(%arg0: i32) -> (i32, i32) {
    %c0_i32 = arith.constant 0 : i32
    %c0_i32_0 = arith.constant 0 : i32
    %c0_i32_1 = arith.constant 0 : i32
    return %c0_i32, %c0_i32_0 : i32, i32
  }
  func.func @transform_4(%arg0: i32) -> (i32, i32) {
    %c0_i32 = arith.constant 0 : i32
    %c0_i32_0 = arith.constant 0 : i32
    %c0_i32_1 = arith.constant 0 : i32
    return %c0_i32, %c0_i32_0 : i32, i32
  }
  func.func @transform_5(%arg0: i32) -> (i32, i32) {
    %c0_i32 = arith.constant 0 : i32
    %c0_i32_0 = arith.constant 0 : i32
    return %arg0, %c0_i32 : i32, i32
  }
}

</mosaic_0001>

<llo_original>
// kernel: tpu_custom_call.1
$region0: #{tpu_custom_call.1}
  #allocation0 [shape = 'u32[]', space=smem, size = 0x4, offset = 0x4, fixed_abs, tag = 'smem constant byte address 0x4 - core index']
  #allocation1 [shape = 'u32[144,128]{1,0:T(1,128)}', space=vmem, size = 0x12000, scoped, tag = 'internal scratch']
  %s0 = inlined_call_operand.hbm [shape: f32[8,64,256], index: 0, kind: input, shape index: {}]
  %s1 = inlined_call_operand.hbm [shape: bf16[256,128], index: 1, kind: input, shape index: {}]
  %s2 = inlined_call_operand.vmem [shape: f32[1,128], index: 2, kind: input, shape index: {}]
  %s3 = inlined_call_operand.hbm [shape: bf16[128,128], index: 3, kind: input, shape index: {}]
  %s4 = inlined_call_operand.vmem [shape: f32[1,128], index: 4, kind: input, shape index: {}]
  %s5 = inlined_call_operand.hbm [shape: f32[8,128], index: 5, kind: output, shape index: {}]
  %s6 = sld [smem:[#allocation0]]
  $region42: #{tpu_custom_call.1} parent=0
    _
  %s8 = ssub.s32 1, %s6
  %s9 = scalar_select 0, %s8, %s6
  $region1: #{tpu_custom_call.1} parent=0
    #allocation2 [shape = 'u8[524288]{0}', space=vmem, size = 0x80000, scoped, tag = 'input window, operand 0, single buffered']
    #allocation3 [shape = 's32[1]{0}', space=sflag, size = 0x4, scoped, tag = 'scoped memory for tpu_custom_call.1']
    #allocation4 [shape = 's32[1]{0}', space=sflag, size = 0x4, scoped, tag = 'scoped memory for tpu_custom_call.1']
    #allocation5 [shape = 'u8[65536]{0}', space=vmem, size = 0x10000, scoped, tag = 'input window, operand 1, single buffered']
    #allocation6 [shape = 's32[1]{0}', space=sflag, size = 0x4, scoped, tag = 'scoped memory for tpu_custom_call.1']
    #allocation7 [shape = 'u8[32768]{0}', space=vmem, size = 0x8000, scoped, tag = 'input window, operand 3, single buffered']
    #allocation8 [shape = 'u8[4096]{0}', space=vmem, size = 0x1000, scoped, tag = 'output window, operand 0, single buffered']
    %10 = vsyncpa [#allocation3], 0
    %11 = vsyncpa [#allocation6], 0
    %12 = vsyncpa [#allocation4], 0
    // Predicated region
    $region2: #{tpu_custom_call.1} parent=1 // pred_check
      _
    $region3: #{tpu_custom_call.1} parent=1 // pred_check_branch
      %14 = sbr.rel (0) target = $region5
    $region4: #{tpu_custom_call.1} parent=1 // pred_region
      %s16 = ssub.s32 16384, 16384
      %17 = vsyncadd [#allocation3], %s16
      %s18 = sshll.u32 [#allocation2], 4
      %s19 = int_to_ptr.vmem [resolvable:$true] %s18
      %24 = dma.hbm_to_vmem [thread:$0]  %s0, 16384, %s19, [#allocation3], 256, 256, 16
    $region5: #{tpu_custom_call.1} parent=1 // pred_fallthru
      _
    // Predicated region
    $region6: #{tpu_custom_call.1} parent=1 // pred_check
      _
    $region7: #{tpu_custom_call.1} parent=1 // pred_check_branch
      %26 = sbr.rel (0) target = $region9
    $region8: #{tpu_custom_call.1} parent=1 // pred_region
      %s28 = ssub.s32 2048, 2048
      %29 = vsyncadd [#allocation6], %s28
      %s30 = sshll.u32 [#allocation5], 4
      %s31 = int_to_ptr.vmem [resolvable:$true] %s30
      %36 = dma.hbm_to_vmem [thread:$0]  %s1, 2048, %s31, [#allocation6], 64, 64, 4
    $region9: #{tpu_custom_call.1} parent=1 // pred_fallthru
      _
    // Predicated region
    $region10: #{tpu_custom_call.1} parent=1 // pred_check
      _
    $region11: #{tpu_custom_call.1} parent=1 // pred_check_branch
      %38 = sbr.rel (0) target = $region13
    $region12: #{tpu_custom_call.1} parent=1 // pred_region
      _
    $region13: #{tpu_custom_call.1} parent=1 // pred_fallthru
      _
    // Predicated region
    $region14: #{tpu_custom_call.1} parent=1 // pred_check
      _
    $region15: #{tpu_custom_call.1} parent=1 // pred_check_branch
      %40 = sbr.rel (0) target = $region17
    $region16: #{tpu_custom_call.1} parent=1 // pred_region
      %s42 = ssub.s32 1024, 1024
      %43 = vsyncadd [#allocation6], %s42
      %s44 = sshll.u32 [#allocation7], 4
      %s45 = int_to_ptr.vmem [resolvable:$true] %s44
      %50 = dma.hbm_to_vmem [thread:$0]  %s3, 1024, %s45, [#allocation6], 64, 64, 4
    $region17: #{tpu_custom_call.1} parent=1 // pred_fallthru
      _
    // Predicated region
    $region18: #{tpu_custom_call.1} parent=1 // pred_check
      _
    $region19: #{tpu_custom_call.1} parent=1 // pred_check_branch
      %52 = sbr.rel (0) target = $region21
    $region20: #{tpu_custom_call.1} parent=1 // pred_region
      _
    $region21: #{tpu_custom_call.1} parent=1 // pred_fallthru
      _
    // Predicated region
    $region22: #{tpu_custom_call.1} parent=1 // pred_check
      _
    $region23: #{tpu_custom_call.1} parent=1 // pred_check_branch
      %54 = sbr.rel (0) target = $region25
    $region24: #{tpu_custom_call.1} parent=1 // pred_region
      %55 = dma.done [#allocation3], 16384
    $region25: #{tpu_custom_call.1} parent=1 // pred_fallthru
      _
    // Predicated region
    $region26: #{tpu_custom_call.1} parent=1 // pred_check
      _
    $region27: #{tpu_custom_call.1} parent=1 // pred_check_branch
      %57 = sbr.rel (0) target = $region29
    $region28: #{tpu_custom_call.1} parent=1 // pred_region
      %58 = dma.done [#allocation6], 2048
    $region29: #{tpu_custom_call.1} parent=1 // pred_fallthru
      _
    // Predicated region
    $region30: #{tpu_custom_call.1} parent=1 // pred_check
      _
    $region31: #{tpu_custom_call.1} parent=1 // pred_check_branch
      %60 = sbr.rel (0) target = $region33
    $region32: #{tpu_custom_call.1} parent=1 // pred_region
      %61 = dma.done [#allocation6], 1024
    $region33: #{tpu_custom_call.1} parent=1 // pred_fallthru
      _
    %v63 = vld [vmem:[#allocation2] sm:$0xff]
    %v64 = vld [vmem:[#allocation2 + $0x8] sm:$0xff]
    %v65 = vld [vmem:[#allocation2 + $0x10] sm:$0xff]
    %v66 = vld [vmem:[#allocation2 + $0x18] sm:$0xff]
    %v67 = vld [vmem:[#allocation2 + $0x20] sm:$0xff]
    %v68 = vld [vmem:[#allocation2 + $0x28] sm:$0xff]
    %v69 = vld [vmem:[#allocation2 + $0x30] sm:$0xff]
    %v70 = vld [vmem:[#allocation2 + $0x38] sm:$0xff]
    %v71 = vld [vmem:[#allocation2 + $0x40] sm:$0xff]
    %v72 = vld [vmem:[#allocation2 + $0x48] sm:$0xff]
    %v73 = vld [vmem:[#allocation2 + $0x50] sm:$0xff]
    %v74 = vld [vmem:[#allocation2 + $0x58] sm:$0xff]
    %v75 = vld [vmem:[#allocation2 + $0x60] sm:$0xff]
    %v76 = vld [vmem:[#allocation2 + $0x68] sm:$0xff]
    %v77 = vld [vmem:[#allocation2 + $0x70] sm:$0xff]
    %v78 = vld [vmem:[#allocation2 + $0x78] sm:$0xff]
    %v79 = vld [vmem:[#allocation2 + $0x80] sm:$0xff]
    %v80 = vld [vmem:[#allocation2 + $0x88] sm:$0xff]
    %v81 = vld [vmem:[#allocation2 + $0x90] sm:$0xff]
    %v82 = vld [vmem:[#allocation2 + $0x98] sm:$0xff]
    %v83 = vld [vmem:[#allocation2 + $0xa0] sm:$0xff]
    %v84 = vld [vmem:[#allocation2 + $0xa8] sm:$0xff]
    %v85 = vld [vmem:[#allocation2 + $0xb0] sm:$0xff]
    %v86 = vld [vmem:[#allocation2 + $0xb8] sm:$0xff]
    %v87 = vld [vmem:[#allocation2 + $0xc0] sm:$0xff]
    %v88 = vld [vmem:[#allocation2 + $0xc8] sm:$0xff]
    %v89 = vld [vmem:[#allocation2 + $0xd0] sm:$0xff]
    %v90 = vld [vmem:[#allocation2 + $0xd8] sm:$0xff]
    %v91 = vld [vmem:[#allocation2 + $0xe0] sm:$0xff]
    %v92 = vld [vmem:[#allocation2 + $0xe8] sm:$0xff]
    %v93 = vld [vmem:[#allocation2 + $0xf0] sm:$0xff]
    %v94 = vld [vmem:[#allocation2 + $0xf8] sm:$0xff]
    %v95 = vld [vmem:[#allocation2 + $0x100] sm:$0xff]
    %v96 = vld [vmem:[#allocation2 + $0x108] sm:$0xff]
    %v97 = vld [vmem:[#allocation2 + $0x110] sm:$0xff]
    %v98 = vld [vmem:[#allocation2 + $0x118] sm:$0xff]
    %v99 = vld [vmem:[#allocation2 + $0x120] sm:$0xff]
    %v100 = vld [vmem:[#allocation2 + $0x128] sm:$0xff]
    %v101 = vld [vmem:[#allocation2 + $0x130] sm:$0xff]
    %v102 = vld [vmem:[#allocation2 + $0x138] sm:$0xff]
    %v103 = vld [vmem:[#allocation2 + $0x140] sm:$0xff]
    %v104 = vld [vmem:[#allocation2 + $0x148] sm:$0xff]
    %v105 = vld [vmem:[#allocation2 + $0x150] sm:$0xff]
    %v106 = vld [vmem:[#allocation2 + $0x158] sm:$0xff]
    %v107 = vld [vmem:[#allocation2 + $0x160] sm:$0xff]
    %v108 = vld [vmem:[#allocation2 + $0x168] sm:$0xff]
    %v109 = vld [vmem:[#allocation2 + $0x170] sm:$0xff]
    %v110 = vld [vmem:[#allocation2 + $0x178] sm:$0xff]
    %v111 = vld [vmem:[#allocation2 + $0x180] sm:$0xff]
    %v112 = vld [vmem:[#allocation2 + $0x188] sm:$0xff]
    %v113 = vld [vmem:[#allocation2 + $0x190] sm:$0xff]
    %v114 = vld [vmem:[#allocation2 + $0x198] sm:$0xff]
    %v115 = vld [vmem:[#allocation2 + $0x1a0] sm:$0xff]
    %v116 = vld [vmem:[#allocation2 + $0x1a8] sm:$0xff]
    %v117 = vld [vmem:[#allocation2 + $0x1b0] sm:$0xff]
    %v118 = vld [vmem:[#allocation2 + $0x1b8] sm:$0xff]
    %v119 = vld [vmem:[#allocation2 + $0x1c0] sm:$0xff]
    %v120 = vld [vmem:[#allocation2 + $0x1c8] sm:$0xff]
    %v121 = vld [vmem:[#allocation2 + $0x1d0] sm:$0xff]
    %v122 = vld [vmem:[#allocation2 + $0x1d8] sm:$0xff]
    %v123 = vld [vmem:[#allocation2 + $0x1e0] sm:$0xff]
    %v124 = vld [vmem:[#allocation2 + $0x1e8] sm:$0xff]
    %v125 = vld [vmem:[#allocation2 + $0x1f0] sm:$0xff]
    %v126 = vld [vmem:[#allocation2 + $0x1f8] sm:$0xff]
    %v127 = vld [vmem:[#allocation2 + $0x200] sm:$0xff]
    %v128 = vld [vmem:[#allocation2 + $0x208] sm:$0xff]
    %v129 = vld [vmem:[#allocation2 + $0x210] sm:$0xff]
    %v130 = vld [vmem:[#allocation2 + $0x218] sm:$0xff]
    %v131 = vld [vmem:[#allocation2 + $0x220] sm:$0xff]
    %v132 = vld [vmem:[#allocation2 + $0x228] sm:$0xff]
    %v133 = vld [vmem:[#allocation2 + $0x230] sm:$0xff]
    %v134 = vld [vmem:[#allocation2 + $0x238] sm:$0xff]
    %v135 = vld [vmem:[#allocation2 + $0x240] sm:$0xff]
    %v136 = vld [vmem:[#allocation2 + $0x248] sm:$0xff]
    %v137 = vld [vmem:[#allocation2 + $0x250] sm:$0xff]
    %v138 = vld [vmem:[#allocation2 + $0x258] sm:$0xff]
    %v139 = vld [vmem:[#allocation2 + $0x260] sm:$0xff]
    %v140 = vld [vmem:[#allocation2 + $0x268] sm:$0xff]
    %v141 = vld [vmem:[#allocation2 + $0x270] sm:$0xff]
    %v142 = vld [vmem:[#allocation2 + $0x278] sm:$0xff]
    %v143 = vld [vmem:[#allocation2 + $0x280] sm:$0xff]
    %v144 = vld [vmem:[#allocation2 + $0x288] sm:$0xff]
    %v145 = vld [vmem:[#allocation2 + $0x290] sm:$0xff]
    %v146 = vld [vmem:[#allocation2 + $0x298] sm:$0xff]
    %v147 = vld [vmem:[#allocation2 + $0x2a0] sm:$0xff]
    %v148 = vld [vmem:[#allocation2 + $0x2a8] sm:$0xff]
    %v149 = vld [vmem:[#allocation2 + $0x2b0] sm:$0xff]
    %v150 = vld [vmem:[#allocation2 + $0x2b8] sm:$0xff]
    %v151 = vld [vmem:[#allocation2 + $0x2c0] sm:$0xff]
    %v152 = vld [vmem:[#allocation2 + $0x2c8] sm:$0xff]
    %v153 = vld [vmem:[#allocation2 + $0x2d0] sm:$0xff]
    %v154 = vld [vmem:[#allocation2 + $0x2d8] sm:$0xff]
    %v155 = vld [vmem:[#allocation2 + $0x2e0] sm:$0xff]
    %v156 = vld [vmem:[#allocation2 + $0x2e8] sm:$0xff]
    %v157 = vld [vmem:[#allocation2 + $0x2f0] sm:$0xff]
    %v158 = vld [vmem:[#allocation2 + $0x2f8] sm:$0xff]
    %v159 = vld [vmem:[#allocation2 + $0x300] sm:$0xff]
    %v160 = vld [vmem:[#allocation2 + $0x308] sm:$0xff]
    %v161 = vld [vmem:[#allocation2 + $0x310] sm:$0xff]
    %v162 = vld [vmem:[#allocation2 + $0x318] sm:$0xff]
    %v163 = vld [vmem:[#allocation2 + $0x320] sm:$0xff]
    %v164 = vld [vmem:[#allocation2 + $0x328] sm:$0xff]
    %v165 = vld [vmem:[#allocation2 + $0x330] sm:$0xff]
    %v166 = vld [vmem:[#allocation2 + $0x338] sm:$0xff]
    %v167 = vld [vmem:[#allocation2 + $0x340] sm:$0xff]
    %v168 = vld [vmem:[#allocation2 + $0x348] sm:$0xff]
    %v169 = vld [vmem:[#allocation2 + $0x350] sm:$0xff]
    %v170 = vld [vmem:[#allocation2 + $0x358] sm:$0xff]
    %v171 = vld [vmem:[#allocation2 + $0x360] sm:$0xff]
    %v172 = vld [vmem:[#allocation2 + $0x368] sm:$0xff]
    %v173 = vld [vmem:[#allocation2 + $0x370] sm:$0xff]
    %v174 = vld [vmem:[#allocation2 + $0x378] sm:$0xff]
    %v175 = vld [vmem:[#allocation2 + $0x380] sm:$0xff]
    %v176 = vld [vmem:[#allocation2 + $0x388] sm:$0xff]
    %v177 = vld [vmem:[#allocation2 + $0x390] sm:$0xff]
    %v178 = vld [vmem:[#allocation2 + $0x398] sm:$0xff]
    %v179 = vld [vmem:[#allocation2 + $0x3a0] sm:$0xff]
    %v180 = vld [vmem:[#allocation2 + $0x3a8] sm:$0xff]
    %v181 = vld [vmem:[#allocation2 + $0x3b0] sm:$0xff]
    %v182 = vld [vmem:[#allocation2 + $0x3b8] sm:$0xff]
    %v183 = vld [vmem:[#allocation2 + $0x3c0] sm:$0xff]
    %v184 = vld [vmem:[#allocation2 + $0x3c8] sm:$0xff]
    %v185 = vld [vmem:[#allocation2 + $0x3d0] sm:$0xff]
    %v186 = vld [vmem:[#allocation2 + $0x3d8] sm:$0xff]
    %v187 = vld [vmem:[#allocation2 + $0x3e0] sm:$0xff]
    %v188 = vld [vmem:[#allocation2 + $0x3e8] sm:$0xff]
    %v189 = vld [vmem:[#allocation2 + $0x3f0] sm:$0xff]
    %v190 = vld [vmem:[#allocation2 + $0x3f8] sm:$0xff]
    %v191 = vmax.f32 %v63, 0.0
    %v192 = vmax.f32 %v64, 0.0
    %v193 = vmax.f32 %v65, 0.0
    %v194 = vmax.f32 %v66, 0.0
    %v195 = vmax.f32 %v67, 0.0
    %v196 = vmax.f32 %v68, 0.0
    %v197 = vmax.f32 %v69, 0.0
    %v198 = vmax.f32 %v70, 0.0
    %v199 = vmax.f32 %v71, 0.0
    %v200 = vmax.f32 %v72, 0.0
    %v201 = vmax.f32 %v73, 0.0
    %v202 = vmax.f32 %v74, 0.0
    %v203 = vmax.f32 %v75, 0.0
    %v204 = vmax.f32 %v76, 0.0
    %v205 = vmax.f32 %v77, 0.0
    %v206 = vmax.f32 %v78, 0.0
    %v207 = vmax.f32 %v79, 0.0
    %v208 = vmax.f32 %v80, 0.0
    %v209 = vmax.f32 %v81, 0.0
    %v210 = vmax.f32 %v82, 0.0
    %v211 = vmax.f32 %v83, 0.0
    %v212 = vmax.f32 %v84, 0.0
    %v213 = vmax.f32 %v85, 0.0
    %v214 = vmax.f32 %v86, 0.0
    %v215 = vmax.f32 %v87, 0.0
    %v216 = vmax.f32 %v88, 0.0
    %v217 = vmax.f32 %v89, 0.0
    %v218 = vmax.f32 %v90, 0.0
    %v219 = vmax.f32 %v91, 0.0
    %v220 = vmax.f32 %v92, 0.0
    %v221 = vmax.f32 %v93, 0.0
    %v222 = vmax.f32 %v94, 0.0
    %v223 = vmax.f32 %v95, 0.0
    %v224 = vmax.f32 %v96, 0.0
    %v225 = vmax.f32 %v97, 0.0
    %v226 = vmax.f32 %v98, 0.0
    %v227 = vmax.f32 %v99, 0.0
    %v228 = vmax.f32 %v100, 0.0
    %v229 = vmax.f32 %v101, 0.0
    %v230 = vmax.f32 %v102, 0.0
    %v231 = vmax.f32 %v103, 0.0
    %v232 = vmax.f32 %v104, 0.0
    %v233 = vmax.f32 %v105, 0.0
    %v234 = vmax.f32 %v106, 0.0
    %v235 = vmax.f32 %v107, 0.0
    %v236 = vmax.f32 %v108, 0.0
    %v237 = vmax.f32 %v109, 0.0
    %v238 = vmax.f32 %v110, 0.0
    %v239 = vmax.f32 %v111, 0.0
    %v240 = vmax.f32 %v112, 0.0
    %v241 = vmax.f32 %v113, 0.0
    %v242 = vmax.f32 %v114, 0.0
    %v243 = vmax.f32 %v115, 0.0
    %v244 = vmax.f32 %v116, 0.0
    %v245 = vmax.f32 %v117, 0.0
    %v246 = vmax.f32 %v118, 0.0
    %v247 = vmax.f32 %v119, 0.0
    %v248 = vmax.f32 %v120, 0.0
    %v249 = vmax.f32 %v121, 0.0
    %v250 = vmax.f32 %v122, 0.0
    %v251 = vmax.f32 %v123, 0.0
    %v252 = vmax.f32 %v124, 0.0
    %v253 = vmax.f32 %v125, 0.0
    %v254 = vmax.f32 %v126, 0.0
    %v255 = vmax.f32 %v127, 0.0
    %v256 = vmax.f32 %v128, 0.0
    %v257 = vmax.f32 %v129, 0.0
    %v258 = vmax.f32 %v130, 0.0
    %v259 = vmax.f32 %v131, 0.0
    %v260 = vmax.f32 %v132, 0.0
    %v261 = vmax.f32 %v133, 0.0
    %v262 = vmax.f32 %v134, 0.0
    %v263 = vmax.f32 %v135, 0.0
    %v264 = vmax.f32 %v136, 0.0
    %v265 = vmax.f32 %v137, 0.0
    %v266 = vmax.f32 %v138, 0.0
    %v267 = vmax.f32 %v139, 0.0
    %v268 = vmax.f32 %v140, 0.0
    %v269 = vmax.f32 %v141, 0.0
    %v270 = vmax.f32 %v142, 0.0
    %v271 = vmax.f32 %v143, 0.0
    %v272 = vmax.f32 %v144, 0.0
    %v273 = vmax.f32 %v145, 0.0
    %v274 = vmax.f32 %v146, 0.0
    %v275 = vmax.f32 %v147, 0.0
    %v276 = vmax.f32 %v148, 0.0
    %v277 = vmax.f32 %v149, 0.0
    %v278 = vmax.f32 %v150, 0.0
    %v279 = vmax.f32 %v151, 0.0
    %v280 = vmax.f32 %v152, 0.0
    %v281 = vmax.f32 %v153, 0.0
    %v282 = vmax.f32 %v154, 0.0
    %v283 = vmax.f32 %v155, 0.0
    %v284 = vmax.f32 %v156, 0.0
    %v285 = vmax.f32 %v157, 0.0
    %v286 = vmax.f32 %v158, 0.0
    %v287 = vmax.f32 %v159, 0.0
    %v288 = vmax.f32 %v160, 0.0
    %v289 = vmax.f32 %v161, 0.0
    %v290 = vmax.f32 %v162, 0.0
    %v291 = vmax.f32 %v163, 0.0
    %v292 = vmax.f32 %v164, 0.0
    %v293 = vmax.f32 %v165, 0.0
    %v294 = vmax.f32 %v166, 0.0
    %v295 = vmax.f32 %v167, 0.0
    %v296 = vmax.f32 %v168, 0.0
    %v297 = vmax.f32 %v169, 0.0
    %v298 = vmax.f32 %v170, 0.0
    %v299 = vmax.f32 %v171, 0.0
    %v300 = vmax.f32 %v172, 0.0
    %v301 = vmax.f32 %v173, 0.0
    %v302 = vmax.f32 %v174, 0.0
    %v303 = vmax.f32 %v175, 0.0
    %v304 = vmax.f32 %v176, 0.0
    %v305 = vmax.f32 %v177, 0.0
    %v306 = vmax.f32 %v178, 0.0
    %v307 = vmax.f32 %v179, 0.0
    %v308 = vmax.f32 %v180, 0.0
    %v309 = vmax.f32 %v181, 0.0
    %v310 = vmax.f32 %v182, 0.0
    %v311 = vmax.f32 %v183, 0.0
    %v312 = vmax.f32 %v184, 0.0
    %v313 = vmax.f32 %v185, 0.0
    %v314 = vmax.f32 %v186, 0.0
    %v315 = vmax.f32 %v187, 0.0
    %v316 = vmax.f32 %v188, 0.0
    %v317 = vmax.f32 %v189, 0.0
    %v318 = vmax.f32 %v190, 0.0
    %v319 = vadd.f32 %v191, %v193
    %v320 = vadd.f32 %v319, %v195
    %v321 = vadd.f32 %v320, %v197
    %v322 = vadd.f32 %v321, %v199
    %v323 = vadd.f32 %v322, %v201
    %v324 = vadd.f32 %v323, %v203
    %v325 = vadd.f32 %v324, %v205
    %v326 = vrot.slane %v325, 4
    %v327 = vadd.f32 %v325, %v326
    %v328 = vrot.slane %v327, 2
    %v329 = vadd.f32 %v327, %v328
    %v330 = vrot.slane %v329, 1
    %v331 = vadd.f32 %v329, %v330
    %v332 = vadd.f32 %v192, %v194
    %v333 = vadd.f32 %v332, %v196
    %v334 = vadd.f32 %v333, %v198
    %v335 = vadd.f32 %v334, %v200
    %v336 = vadd.f32 %v335, %v202
    %v337 = vadd.f32 %v336, %v204
    %v338 = vadd.f32 %v337, %v206
    %v339 = vrot.slane %v338, 4
    %v340 = vadd.f32 %v338, %v339
    %v341 = vrot.slane %v340, 2
    %v342 = vadd.f32 %v340, %v341
    %v343 = vrot.slane %v342, 1
    %v344 = vadd.f32 %v342, %v343
    %v345 = vadd.f32 %v207, %v209
    %v346 = vadd.f32 %v345, %v211
    %v347 = vadd.f32 %v346, %v213
    %v348 = vadd.f32 %v347, %v215
    %v349 = vadd.f32 %v348, %v217
    %v350 = vadd.f32 %v349, %v219
    %v351 = vadd.f32 %v350, %v221
    %v352 = vrot.slane %v351, 4
    %v353 = vadd.f32 %v351, %v352
    %v354 = vrot.slane %v353, 2
    %v355 = vadd.f32 %v353, %v354
    %v356 = vrot.slane %v355, 1
    %v357 = vadd.f32 %v355, %v356
    %v358 = vadd.f32 %v208, %v210
    %v359 = vadd.f32 %v358, %v212
    %v360 = vadd.f32 %v359, %v214
    %v361 = vadd.f32 %v360, %v216
    %v362 = vadd.f32 %v361, %v218
    %v363 = vadd.f32 %v362, %v220
    %v364 = vadd.f32 %v363, %v222
    %v365 = vrot.slane %v364, 4
    %v366 = vadd.f32 %v364, %v365
    %v367 = vrot.slane %v366, 2
    %v368 = vadd.f32 %v366, %v367
    %v369 = vrot.slane %v368, 1
    %v370 = vadd.f32 %v368, %v369
    %v371 = vadd.f32 %v223, %v225
    %v372 = vadd.f32 %v371, %v227
    %v373 = vadd.f32 %v372, %v229
    %v374 = vadd.f32 %v373, %v231
    %v375 = vadd.f32 %v374, %v233
    %v376 = vadd.f32 %v375, %v235
    %v377 = vadd.f32 %v376, %v237
    %v378 = vrot.slane %v377, 4
    %v379 = vadd.f32 %v377, %v378
    %v380 = vrot.slane %v379, 2
    %v381 = vadd.f32 %v379, %v380
    %v382 = vrot.slane %v381, 1
    %v383 = vadd.f32 %v381, %v382
    %v384 = vadd.f32 %v224, %v226
    %v385 = vadd.f32 %v384, %v228
    %v386 = vadd.f32 %v385, %v230
    %v387 = vadd.f32 %v386, %v232
    %v388 = vadd.f32 %v387, %v234
    %v389 = vadd.f32 %v388, %v236
    %v390 = vadd.f32 %v389, %v238
    %v391 = vrot.slane %v390, 4
    %v392 = vadd.f32 %v390, %v391
    %v393 = vrot.slane %v392, 2
    %v394 = vadd.f32 %v392, %v393
    %v395 = vrot.slane %v394, 1
    %v396 = vadd.f32 %v394, %v395
    %v397 = vadd.f32 %v239, %v241
    %v398 = vadd.f32 %v397, %v243
    %v399 = vadd.f32 %v398, %v245
    %v400 = vadd.f32 %v399, %v247
    %v401 = vadd.f32 %v400, %v249
    %v402 = vadd.f32 %v401, %v251
    %v403 = vadd.f32 %v402, %v253
    %v404 = vrot.slane %v403, 4
    %v405 = vadd.f32 %v403, %v404
    %v406 = vrot.slane %v405, 2
    %v407 = vadd.f32 %v405, %v406
    %v408 = vrot.slane %v407, 1
    %v409 = vadd.f32 %v407, %v408
    %v410 = vadd.f32 %v240, %v242
    %v411 = vadd.f32 %v410, %v244
    %v412 = vadd.f32 %v411, %v246
    %v413 = vadd.f32 %v412, %v248
    %v414 = vadd.f32 %v413, %v250
    %v415 = vadd.f32 %v414, %v252
    %v416 = vadd.f32 %v415, %v254
    %v417 = vrot.slane %v416, 4
    %v418 = vadd.f32 %v416, %v417
    %v419 = vrot.slane %v418, 2
    %v420 = vadd.f32 %v418, %v419
    %v421 = vrot.slane %v420, 1
    %v422 = vadd.f32 %v420, %v421
    %v423 = vadd.f32 %v255, %v257
    %v424 = vadd.f32 %v423, %v259
    %v425 = vadd.f32 %v424, %v261
    %v426 = vadd.f32 %v425, %v263
    %v427 = vadd.f32 %v426, %v265
    %v428 = vadd.f32 %v427, %v267
    %v429 = vadd.f32 %v428, %v269
    %v430 = vrot.slane %v429, 4
    %v431 = vadd.f32 %v429, %v430
    %v432 = vrot.slane %v431, 2
    %v433 = vadd.f32 %v431, %v432
    %v434 = vrot.slane %v433, 1
    %v435 = vadd.f32 %v433, %v434
    %v436 = vadd.f32 %v256, %v258
    %v437 = vadd.f32 %v436, %v260
    %v438 = vadd.f32 %v437, %v262
    %v439 = vadd.f32 %v438, %v264
    %v440 = vadd.f32 %v439, %v266
    %v441 = vadd.f32 %v440, %v268
    %v442 = vadd.f32 %v441, %v270
    %v443 = vrot.slane %v442, 4
    %v444 = vadd.f32 %v442, %v443
    %v445 = vrot.slane %v444, 2
    %v446 = vadd.f32 %v444, %v445
    %v447 = vrot.slane %v446, 1
    %v448 = vadd.f32 %v446, %v447
    %v449 = vadd.f32 %v271, %v273
    %v450 = vadd.f32 %v449, %v275
    %v451 = vadd.f32 %v450, %v277
    %v452 = vadd.f32 %v451, %v279
    %v453 = vadd.f32 %v452, %v281
    %v454 = vadd.f32 %v453, %v283
    %v455 = vadd.f32 %v454, %v285
    %v456 = vrot.slane %v455, 4
    %v457 = vadd.f32 %v455, %v456
    %v458 = vrot.slane %v457, 2
    %v459 = vadd.f32 %v457, %v458
    %v460 = vrot.slane %v459, 1
    %v461 = vadd.f32 %v459, %v460
    %v462 = vadd.f32 %v272, %v274
    %v463 = vadd.f32 %v462, %v276
    %v464 = vadd.f32 %v463, %v278
    %v465 = vadd.f32 %v464, %v280
    %v466 = vadd.f32 %v465, %v282
    %v467 = vadd.f32 %v466, %v284
    %v468 = vadd.f32 %v467, %v286
    %v469 = vrot.slane %v468, 4
    %v470 = vadd.f32 %v468, %v469
    %v471 = vrot.slane %v470, 2
    %v472 = vadd.f32 %v470, %v471
    %v473 = vrot.slane %v472, 1
    %v474 = vadd.f32 %v472, %v473
    %v475 = vadd.f32 %v287, %v289
    %v476 = vadd.f32 %v475, %v291
    %v477 = vadd.f32 %v476, %v293
    %v478 = vadd.f32 %v477, %v295
    %v479 = vadd.f32 %v478, %v297
    %v480 = vadd.f32 %v479, %v299
    %v481 = vadd.f32 %v480, %v301
    %v482 = vrot.slane %v481, 4
    %v483 = vadd.f32 %v481, %v482
    %v484 = vrot.slane %v483, 2
    %v485 = vadd.f32 %v483, %v484
    %v486 = vrot.slane %v485, 1
    %v487 = vadd.f32 %v485, %v486
    %v488 = vadd.f32 %v288, %v290
    %v489 = vadd.f32 %v488, %v292
    %v490 = vadd.f32 %v489, %v294
    %v491 = vadd.f32 %v490, %v296
    %v492 = vadd.f32 %v491, %v298
    %v493 = vadd.f32 %v492, %v300
    %v494 = vadd.f32 %v493, %v302
    %v495 = vrot.slane %v494, 4
    %v496 = vadd.f32 %v494, %v495
    %v497 = vrot.slane %v496, 2
    %v498 = vadd.f32 %v496, %v497
    %v499 = vrot.slane %v498, 1
    %v500 = vadd.f32 %v498, %v499
    %v501 = vadd.f32 %v303, %v305
    %v502 = vadd.f32 %v501, %v307
    %v503 = vadd.f32 %v502, %v309
    %v504 = vadd.f32 %v503, %v311
    %v505 = vadd.f32 %v504, %v313
    %v506 = vadd.f32 %v505, %v315
    %v507 = vadd.f32 %v506, %v317
    %v508 = vrot.slane %v507, 4
    %v509 = vadd.f32 %v507, %v508
    %v510 = vrot.slane %v509, 2
    %v511 = vadd.f32 %v509, %v510
    %v512 = vrot.slane %v511, 1
    %v513 = vadd.f32 %v511, %v512
    %v514 = vadd.f32 %v304, %v306
    %v515 = vadd.f32 %v514, %v308
    %v516 = vadd.f32 %v515, %v310
    %v517 = vadd.f32 %v516, %v312
    %v518 = vadd.f32 %v517, %v314
    %v519 = vadd.f32 %v518, %v316
    %v520 = vadd.f32 %v519, %v318
    %v521 = vrot.slane %v520, 4
    %v522 = vadd.f32 %v520, %v521
    %v523 = vrot.slane %v522, 2
    %v524 = vadd.f32 %v522, %v523
    %v525 = vrot.slane %v524, 1
    %v526 = vadd.f32 %v524, %v525
    %v527 = vrcp.pop 64.0
    %v528 = vmul.f32 %v331, %v527
    %v529 = vmul.f32 %v344, %v527
    %v530 = vmul.f32 %v357, %v527
    %v531 = vmul.f32 %v370, %v527
    %v532 = vmul.f32 %v383, %v527
    %v533 = vmul.f32 %v396, %v527
    %v534 = vmul.f32 %v409, %v527
    %v535 = vmul.f32 %v422, %v527
    %v536 = vmul.f32 %v435, %v527
    %v537 = vmul.f32 %v448, %v527
    %v538 = vmul.f32 %v461, %v527
    %v539 = vmul.f32 %v474, %v527
    %v540 = vmul.f32 %v487, %v527
    %v541 = vmul.f32 %v500, %v527
    %v542 = vmul.f32 %v513, %v527
    %v543 = vmul.f32 %v526, %v527
    %v544 = vpack.c.bf16 %v528, %v528
    %v545 = vpack.c.bf16 %v529, %v529
    %v546 = vpack.c.bf16 %v530, %v530
    %v547 = vpack.c.bf16 %v531, %v531
    %v548 = vpack.c.bf16 %v532, %v532
    %v549 = vpack.c.bf16 %v533, %v533
    %v550 = vpack.c.bf16 %v534, %v534
    %v551 = vpack.c.bf16 %v535, %v535
    %v552 = vpack.c.bf16 %v536, %v536
    %v553 = vpack.c.bf16 %v537, %v537
    %v554 = vpack.c.bf16 %v538, %v538
    %v555 = vpack.c.bf16 %v539, %v539
    %v556 = vpack.c.bf16 %v540, %v540
    %v557 = vpack.c.bf16 %v541, %v541
    %v558 = vpack.c.bf16 %v542, %v542
    %v559 = vpack.c.bf16 %v543, %v543
    %v560 = vld [vmem:[#allocation5] sm:$0xf]
    %v561 = vld [vmem:[#allocation5 + $0x4] sm:$0xf]
    %v562 = vld [vmem:[#allocation5 + $0x8] sm:$0xf]
    %v563 = vld [vmem:[#allocation5 + $0xc] sm:$0xf]
    %v564 = vld [vmem:[#allocation5 + $0x10] sm:$0xf]
    %v565 = vld [vmem:[#allocation5 + $0x14] sm:$0xf]
    %v566 = vld [vmem:[#allocation5 + $0x18] sm:$0xf]
    %v567 = vld [vmem:[#allocation5 + $0x1c] sm:$0xf]
    %v568 = vld [vmem:[#allocation5 + $0x20] sm:$0xf]
    %v569 = vld [vmem:[#allocation5 + $0x24] sm:$0xf]
    %v570 = vld [vmem:[#allocation5 + $0x28] sm:$0xf]
    %v571 = vld [vmem:[#allocation5 + $0x2c] sm:$0xf]
    %v572 = vld [vmem:[#allocation5 + $0x30] sm:$0xf]
    %v573 = vld [vmem:[#allocation5 + $0x34] sm:$0xf]
    %v574 = vld [vmem:[#allocation5 + $0x38] sm:$0xf]
    %v575 = vld [vmem:[#allocation5 + $0x3c] sm:$0xf]
    %v576 = vld [vmem:[#allocation5 + $0x40] sm:$0xf]
    %v577 = vld [vmem:[#allocation5 + $0x44] sm:$0xf]
    %v578 = vld [vmem:[#allocation5 + $0x48] sm:$0xf]
    %v579 = vld [vmem:[#allocation5 + $0x4c] sm:$0xf]
    %v580 = vld [vmem:[#allocation5 + $0x50] sm:$0xf]
    %v581 = vld [vmem:[#allocation5 + $0x54] sm:$0xf]
    %v582 = vld [vmem:[#allocation5 + $0x58] sm:$0xf]
    %v583 = vld [vmem:[#allocation5 + $0x5c] sm:$0xf]
    %v584 = vld [vmem:[#allocation5 + $0x60] sm:$0xf]
    %v585 = vld [vmem:[#allocation5 + $0x64] sm:$0xf]
    %v586 = vld [vmem:[#allocation5 + $0x68] sm:$0xf]
    %v587 = vld [vmem:[#allocation5 + $0x6c] sm:$0xf]
    %v588 = vld [vmem:[#allocation5 + $0x70] sm:$0xf]
    %v589 = vld [vmem:[#allocation5 + $0x74] sm:$0xf]
    %v590 = vld [vmem:[#allocation5 + $0x78] sm:$0xf]
    %v591 = vld [vmem:[#allocation5 + $0x7c] sm:$0xf]
    %v592 = vld [vmem:[%s2] sm:$0x1]
    %v594 = vlaneseq
    %v595 = vshrl.u32 %v594, 7
    %v596 = vsub.s32 0, %v595
    %v597 = vrot.slane %v592, %v596
    %v615 = vunpack.c.l.b16 %v544
    %v616 = vunpack.c.l.b16 %v545
    %v617 = vunpack.c.l.b16 %v546
    %v618 = vunpack.c.l.b16 %v547
    %v619 = vunpack.c.l.b16 %v548
    %v620 = vunpack.c.l.b16 %v549
    %v621 = vunpack.c.l.b16 %v550
    %v622 = vunpack.c.l.b16 %v551
    %v623 = vunpack.c.l.b16 %v552
    %v624 = vunpack.c.l.b16 %v553
    %v625 = vunpack.c.l.b16 %v554
    %v626 = vunpack.c.l.b16 %v555
    %v627 = vunpack.c.l.b16 %v556
    %v628 = vunpack.c.l.b16 %v557
    %v629 = vunpack.c.l.b16 %v558
    %v630 = vunpack.c.l.b16 %v559
    %vm631 = vcmask 1041409
    %v632 = vsel %vm631, %v617, %v615
    %vm633 = vcmask 1042434
    %v634 = vsel %vm633, %v619, %v632
    %vm635 = vcmask 1043459
    %v636 = vsel %vm635, %v621, %v634
    %vm637 = vcmask 1044484
    %v638 = vsel %vm637, %v623, %v636
    %vm639 = vcmask 1045509
    %v640 = vsel %vm639, %v625, %v638
    %vm641 = vcmask 1046534
    %v642 = vsel %vm641, %v627, %v640
    %vm643 = vcmask 1047559
    %v644 = vsel %vm643, %v629, %v642
    %v645 = vsel %vm631, %v618, %v616
    %v646 = vsel %vm633, %v620, %v645
    %v647 = vsel %vm635, %v622, %v646
    %v648 = vsel %vm637, %v624, %v647
    %v649 = vsel %vm639, %v626, %v648
    %v650 = vsel %vm641, %v628, %v649
    %v651 = vsel %vm643, %v630, %v650
    %v652 = vpack.c.b16 %v644, %v644
    %v653 = vpack.c.b16 %v651, %v651
    %v688 = vunpack.c.l.b16 %v560
    %v689 = vunpack.c.l.b16 %v561
    %v690 = vunpack.c.l.b16 %v562
    %v691 = vunpack.c.l.b16 %v563
    %v692 = vunpack.c.l.b16 %v564
    %v693 = vunpack.c.l.b16 %v565
    %v694 = vunpack.c.l.b16 %v566
    %v695 = vunpack.c.l.b16 %v567
    %v696 = vunpack.c.l.b16 %v568
    %v697 = vunpack.c.l.b16 %v569
    %v698 = vunpack.c.l.b16 %v570
    %v699 = vunpack.c.l.b16 %v571
    %v700 = vunpack.c.l.b16 %v572
    %v701 = vunpack.c.l.b16 %v573
    %v702 = vunpack.c.l.b16 %v574
    %v703 = vunpack.c.l.b16 %v575
    %v704 = vunpack.c.l.b16 %v576
    %v705 = vunpack.c.l.b16 %v577
    %v706 = vunpack.c.l.b16 %v578
    %v707 = vunpack.c.l.b16 %v579
    %v708 = vunpack.c.l.b16 %v580
    %v709 = vunpack.c.l.b16 %v581
    %v710 = vunpack.c.l.b16 %v582
    %v711 = vunpack.c.l.b16 %v583
    %v712 = vunpack.c.l.b16 %v584
    %v713 = vunpack.c.l.b16 %v585
    %v714 = vunpack.c.l.b16 %v586
    %v715 = vunpack.c.l.b16 %v587
    %v716 = vunpack.c.l.b16 %v588
    %v717 = vunpack.c.l.b16 %v589
    %v718 = vunpack.c.l.b16 %v590
    %v719 = vunpack.c.l.b16 %v591
    %v720 = vpack.c.b16 %v689, %v688
    %v721 = vpack.c.b16 %v691, %v690
    %v722 = vpack.c.b16 %v693, %v692
    %v723 = vpack.c.b16 %v695, %v694
    %v724 = vpack.c.b16 %v697, %v696
    %v725 = vpack.c.b16 %v699, %v698
    %v726 = vpack.c.b16 %v701, %v700
    %v727 = vpack.c.b16 %v703, %v702
    %v728 = vpack.c.b16 %v705, %v704
    %v729 = vpack.c.b16 %v707, %v706
    %v730 = vpack.c.b16 %v709, %v708
    %v731 = vpack.c.b16 %v711, %v710
    %v732 = vpack.c.b16 %v713, %v712
    %v733 = vpack.c.b16 %v715, %v714
    %v734 = vpack.c.b16 %v717, %v716
    %v735 = vpack.c.b16 %v719, %v718
    %752 = vmatprep.subr.bf16.mxu0 0
    %753 = vmatpush1.bf16.msra.mxu0 %v727
    %754 = vmatprep.subr.bf16.mxu0 0
    %755 = vmatpush1.bf16.msra.mxu0 %v726
    %756 = vmatprep.subr.bf16.mxu0 0
    %757 = vmatpush1.bf16.msra.mxu0 %v725
    %758 = vmatprep.subr.bf16.mxu0 0
    %759 = vmatpush1.bf16.msra.mxu0 %v724
    %760 = vmatprep.subr.bf16.mxu0 0
    %761 = vmatpush1.bf16.msra.mxu0 %v723
    %762 = vmatprep.subr.bf16.mxu0 0
    %763 = vmatpush1.bf16.msra.mxu0 %v722
    %764 = vmatprep.subr.bf16.mxu0 0
    %765 = vmatpush1.bf16.msra.mxu0 %v721
    %766 = vmatprep.subr.bf16.mxu0 0
    %767 = vmatpush1.bf16.msra.mxu0 %v720
    %768 = vmatprep.subr.bf16.mxu0 0
    %769 = vmatpush2.bf16.msra.mxu0 %v735
    %770 = vmatprep.subr.bf16.mxu0 0
    %771 = vmatpush2.bf16.msra.mxu0 %v734
    %772 = vmatprep.subr.bf16.mxu0 0
    %773 = vmatpush2.bf16.msra.mxu0 %v733
    %774 = vmatprep.subr.bf16.mxu0 0
    %775 = vmatpush2.bf16.msra.mxu0 %v732
    %776 = vmatprep.subr.bf16.mxu0 0
    %777 = vmatpush2.bf16.msra.mxu0 %v731
    %778 = vmatprep.subr.bf16.mxu0 0
    %779 = vmatpush2.bf16.msra.mxu0 %v730
    %780 = vmatprep.subr.bf16.mxu0 0
    %781 = vmatpush2.bf16.msra.mxu0 %v729
    %782 = vmatprep.subr.bf16.mxu0 0
    %783 = vmatpush2.bf16.msra.mxu0 %v728
    %784 = vmatprep.mubr.bf16.mxu0 %v653
    %785 = vmatmul.mubr.bf16.gmra.mxu0 %v652
    %v786 = vpop.f32.mrf.mxu0
    %v787 = vadd.f32 %v597, %v786
    %v788 = vpop.f32.mrf.mxu0
    %v789 = vpop.f32.mrf.mxu0
    %v790 = vpop.f32.mrf.mxu0
    %791 = vdwg.mxu0
    %v792 = vmax.f32 %v787, 0.0
    %v793 = vpack.c.bf16 %v792, %v792
    %v794 = vld [vmem:[#allocation7] sm:$0xf]
    %v795 = vld [vmem:[#allocation7 + $0x4] sm:$0xf]
    %v796 = vld [vmem:[#allocation7 + $0x8] sm:$0xf]
    %v797 = vld [vmem:[#allocation7 + $0xc] sm:$0xf]
    %v798 = vld [vmem:[#allocation7 + $0x10] sm:$0xf]
    %v799 = vld [vmem:[#allocation7 + $0x14] sm:$0xf]
    %v800 = vld [vmem:[#allocation7 + $0x18] sm:$0xf]
    %v801 = vld [vmem:[#allocation7 + $0x1c] sm:$0xf]
    %v802 = vld [vmem:[#allocation7 + $0x20] sm:$0xf]
    %v803 = vld [vmem:[#allocation7 + $0x24] sm:$0xf]
    %v804 = vld [vmem:[#allocation7 + $0x28] sm:$0xf]
    %v805 = vld [vmem:[#allocation7 + $0x2c] sm:$0xf]
    %v806 = vld [vmem:[#allocation7 + $0x30] sm:$0xf]
    %v807 = vld [vmem:[#allocation7 + $0x34] sm:$0xf]
    %v808 = vld [vmem:[#allocation7 + $0x38] sm:$0xf]
    %v809 = vld [vmem:[#allocation7 + $0x3c] sm:$0xf]
    %v810 = vld [vmem:[%s4] sm:$0x1]
    %v812 = vlaneseq
    %v813 = vshrl.u32 %v812, 7
    %v814 = vsub.s32 0, %v813
    %v815 = vrot.slane %v810, %v814
    %v833 = vunpack.c.l.b16 %v794
    %v834 = vunpack.c.l.b16 %v795
    %v835 = vunpack.c.l.b16 %v796
    %v836 = vunpack.c.l.b16 %v797
    %v837 = vunpack.c.l.b16 %v798
    %v838 = vunpack.c.l.b16 %v799
    %v839 = vunpack.c.l.b16 %v800
    %v840 = vunpack.c.l.b16 %v801
    %v841 = vunpack.c.l.b16 %v802
    %v842 = vunpack.c.l.b16 %v803
    %v843 = vunpack.c.l.b16 %v804
    %v844 = vunpack.c.l.b16 %v805
    %v845 = vunpack.c.l.b16 %v806
    %v846 = vunpack.c.l.b16 %v807
    %v847 = vunpack.c.l.b16 %v808
    %v848 = vunpack.c.l.b16 %v809
    %v849 = vpack.c.b16 %v834, %v833
    %v850 = vpack.c.b16 %v836, %v835
    %v851 = vpack.c.b16 %v838, %v837
    %v852 = vpack.c.b16 %v840, %v839
    %v853 = vpack.c.b16 %v842, %v841
    %v854 = vpack.c.b16 %v844, %v843
    %v855 = vpack.c.b16 %v846, %v845
    %v856 = vpack.c.b16 %v848, %v847
    %865 = vmatprep.subr.bf16.mxu0 0
    %866 = vmatpush1.bf16.msra.mxu0 %v856
    %867 = vmatprep.subr.bf16.mxu0 0
    %868 = vmatpush1.bf16.msra.mxu0 %v855
    %869 = vmatprep.subr.bf16.mxu0 0
    %870 = vmatpush1.bf16.msra.mxu0 %v854
    %871 = vmatprep.subr.bf16.mxu0 0
    %872 = vmatpush1.bf16.msra.mxu0 %v853
    %873 = vmatprep.subr.bf16.mxu0 0
    %874 = vmatpush1.bf16.msra.mxu0 %v852
    %875 = vmatprep.subr.bf16.mxu0 0
    %876 = vmatpush1.bf16.msra.mxu0 %v851
    %877 = vmatprep.subr.bf16.mxu0 0
    %878 = vmatpush1.bf16.msra.mxu0 %v850
    %879 = vmatprep.subr.bf16.mxu0 0
    %880 = vmatpush1.bf16.msra.mxu0 %v849
    %881 = vmatprep.subr.bf16.mxu0 0
    %882 = vmatpush2.bf16.msra.mxu0 0
    %883 = vmatprep.subr.bf16.mxu0 0
    %884 = vmatpush2.bf16.msra.mxu0 0
    %885 = vmatprep.subr.bf16.mxu0 0
    %886 = vmatpush2.bf16.msra.mxu0 0
    %887 = vmatprep.subr.bf16.mxu0 0
    %888 = vmatpush2.bf16.msra.mxu0 0
    %889 = vmatprep.subr.bf16.mxu0 0
    %890 = vmatpush2.bf16.msra.mxu0 0
    %891 = vmatprep.subr.bf16.mxu0 0
    %892 = vmatpush2.bf16.msra.mxu0 0
    %893 = vmatprep.subr.bf16.mxu0 0
    %894 = vmatpush2.bf16.msra.mxu0 0
    %895 = vmatprep.subr.bf16.mxu0 0
    %896 = vmatpush2.bf16.msra.mxu0 0
    %897 = vmatprep.mubr.bf16.mxu0 0
    %898 = vmatmul.mubr.bf16.gmra.mxu0 %v793
    %v899 = vpop.f32.mrf.mxu0
    %v900 = vadd.f32 %v815, %v899
    %v901 = vpop.f32.mrf.mxu0
    %v902 = vpop.f32.mrf.mxu0
    %v903 = vpop.f32.mrf.mxu0
    %904 = vdwg.mxu0
    %905 = vmax.xlane.f32.xlu0 %v900
    %v906 = vpop.xlane.xlu0 %905
    %v907 = vsub.f32 %v900, %v906
    %v908 = vmul.f32 %v907, 1.442695
    %v909 = vpow.pop %v908
    %910 = vadd.xlane.f32.xlu0 %v909
    %v911 = vpop.xlane.xlu0 %910
    %v912 = vlog2.pop %v911
    %v913 = vmul.f32 %v912, 0.6931472
    %v914 = vadd.f32 %v906, %v913
    %v915 = vsub.f32 %v900, %v914
    %916 = vst [vmem:[#allocation8] sm:$0xff] %v915
    // Predicated region
    $region34: #{tpu_custom_call.1} parent=1 // pred_check
      _
    $region35: #{tpu_custom_call.1} parent=1 // pred_check_branch
      %918 = sbr.rel (0) target = $region37
    $region36: #{tpu_custom_call.1} parent=1 // pred_region
      %s920 = ssub.s32 128, 128
      %921 = vsyncadd [#allocation4], %s920
      %s923 = sshll.u32 [#allocation8], 4
      %s924 = int_to_ptr.vmem [resolvable:$true] %s923
      %926 = dma.vmem_to_hbm [thread:$0]  %s924, 128, %s5, [#allocation4]
    $region37: #{tpu_custom_call.1} parent=1 // pred_fallthru
      _
    // Predicated region
    $region38: #{tpu_custom_call.1} parent=1 // pred_check
      _
    $region39: #{tpu_custom_call.1} parent=1 // pred_check_branch
      %928 = sbr.rel (0) target = $region41
    $region40: #{tpu_custom_call.1} parent=1 // pred_region
      %929 = dma.done [#allocation4], 128
    $region41: #{tpu_custom_call.1} parent=1 // pred_fallthru
      _
    %930 = vsyncpa [#allocation3], 1
    %931 = vsyncpa [#allocation6], 1
    %932 = vsyncpa [#allocation4], 1

</llo_original>
